<compile_context>
chip_gen: v5e
topology: v5e:2x2
jax: 0.10.0
libtpu: 0.0.40
codegen_flags: <defaults>
</compile_context>

<pallas_src>
import jax
import jax.numpy as jnp
from jax.experimental import pallas as pl
from jax.experimental.pallas import tpu as pltpu


def _round_up(x, m):
    return ((x + m - 1) // m) * m


def _tpu_generation():
    """Best-effort TPU generation (5, 6, 7) for tile / VMEM sizing; None if unknown."""
    try:
        kind = jax.devices()[0].device_kind.lower()
    except Exception:
        return None
    for tag, gen in (("v5", 5), ("v6", 6), ("v7", 7), ("7x", 7)):
        if tag in kind:
            return gen
    return None


# ---------------------------------------------------------------------------
# Kernels
# ---------------------------------------------------------------------------

def _linear_kernel_whole(x_ref, wt_ref, b_ref, o_ref):
    # Whole problem in one un-padded block (no grid).  wt is (D_in, D_out).
    o_ref[...] = (
        jnp.dot(x_ref[...], wt_ref[...], preferred_element_type=jnp.float32)
        + b_ref[...]
    ).astype(o_ref.dtype)


def _linear_kernel_single_k(x_ref, w_ref, b_ref, o_ref):
    # K fits one tile: no accumulator, no pl.when, bias fused into the epilogue.
    o_ref[...] = (
        jnp.dot(x_ref[...], w_ref[...], preferred_element_type=jnp.float32)
        + b_ref[...]
    ).astype(o_ref.dtype)


def _linear_kernel_acc_out(x_ref, w_ref, b_ref, o_ref):
    # Multi-k, f32 output: accumulate directly into the VMEM-resident output
    # block (its index_map ignores k).  Bias seeds the accumulator at k == 0.
    @pl.when(pl.program_id(2) == 0)
    def _():
        o_ref[...] = jnp.broadcast_to(b_ref[...], o_ref.shape)

    o_ref[...] += jnp.dot(x_ref[...], w_ref[...], preferred_element_type=jnp.float32)


def _linear_kernel_acc_scratch(x_ref, w_ref, b_ref, o_ref, acc_ref):
    # Multi-k, non-f32 output: f32 scratch accumulator, cast once at k == last.
    k = pl.program_id(2)

    @pl.when(k == 0)
    def _():
        acc_ref[...] = jnp.broadcast_to(b_ref[...], acc_ref.shape)

    acc_ref[...] += jnp.dot(x_ref[...], w_ref[...], preferred_element_type=jnp.float32)

    @pl.when(k == pl.num_programs(2) - 1)
    def _():
        o_ref[...] = acc_ref[...].astype(o_ref.dtype)


# ---------------------------------------------------------------------------
# Wrappers
# ---------------------------------------------------------------------------

def _default_nk_tiles(d_in, d_out, gen):
    if gen in (5, 6):
        cap_n, cap_k = 2048, 1024      # 128 MiB VMEM: wide N keeps vst/MXU fed
    else:                              # v7x (64 MiB / TC) or unknown: stay safe
        cap_n, cap_k = 1024, 1024
    tn = min(cap_n, _round_up(d_out, 128))
    tk = min(cap_k, _round_up(d_in, 128))
    return tn, tk


def prepare_linear_params(weight, bias, *, tn=None, tk=None, compute_dtype=None):
    """Pad + transpose the nn.Linear weight ONCE (cache the result across calls).

    weight: (D_out, D_in), bias: (D_out,).  Returns a dict with the (K_pad, N_pad)
    transposed weight, the (1, N_pad) f32 bias row, and tile sizes.  Passing
    compute_dtype=jnp.bfloat16 opts into the bf16 MXU path (f32 accumulation kept;
    numerics change slightly, so it is opt-in).
    """
    d_out, d_in = weight.shape
    gen = _tpu_generation()
    tn_def, tk_def = _default_nk_tiles(d_in, d_out, gen)
    tn = tn if tn is not None else tn_def
    tk = tk if tk is not None else tk_def
    if tn % 128 != 0 or tk % 128 != 0:
        raise ValueError(f"tn/tk must be multiples of 128, got tn={tn}, tk={tk}")

    np_ = _round_up(d_out, tn)
    kp = _round_up(d_in, tk)
    w_dtype = compute_dtype if compute_dtype is not None else weight.dtype
    # Zero padding along K is exact (padded rows contribute 0 to the dot product);
    # padded N columns are sliced off after the kernel.
    w_t = jnp.pad(weight.T.astype(w_dtype), ((0, kp - d_in), (0, np_ - d_out)))
    b_row = jnp.pad(bias.astype(jnp.float32), (0, np_ - d_out)).reshape(1, np_)
    return dict(w_t=w_t, b=b_row, d_in=d_in, d_out=d_out, tn=tn, tk=tk, gen=gen)


def _fits_single_block(batch, d_in, d_out, itemsize):
    total = itemsize * (batch * d_in + d_out * d_in + batch * d_out) + 4 * d_out
    # Padding-avoidance only pays while everything is tiny; stay well under the
    # smallest default scoped-VMEM budget (16 MiB on v5e).
    return total <= (4 << 20) and batch <= 1024 and d_in <= 2048 and d_out <= 2048


def _linear_forward_whole(x, weight, bias):
    batch, _ = x.shape
    d_out = weight.shape[0]
    return pl.pallas_call(
        _linear_kernel_whole,
        out_shape=jax.ShapeDtypeStruct((batch, d_out), x.dtype),
    )(x, weight.T, bias.reshape(1, d_out))


def _vmem_limit_bytes(tm, tn, tk, in_bytes, out_bytes, use_acc, gen):
    # Actual double-buffered footprint + headroom for Mosaic internal scratch,
    # capped per generation (v7x has only 64 MiB VMEM per TensorCore).
    footprint = 2 * (tm * tk * in_bytes + tk * tn * in_bytes + tm * tn * out_bytes)
    footprint += 2 * tn * 4                       # bias row (k-invariant)
    if use_acc:
        footprint += tm * tn * 4                  # f32 scratch accumulator
    limit = footprint + (16 << 20)
    cap = (100 << 20) if gen in (5, 6) else (48 << 20)
    return int(min(limit, cap))


def _linear_forward_tiled(x, params, *, tm=None):
    w_t, b_row = params["w_t"], params["b"]
    d_in, d_out = params["d_in"], params["d_out"]
    tn, tk, gen = params["tn"], params["tk"], params["gen"]
    kp, np_ = w_t.shape
    batch, d_in_x = x.shape
    if d_in_x != d_in:
        raise ValueError(f"x has D_in={d_in_x}, prepared params expect {d_in}")

    compute_dtype = w_t.dtype
    m_align = 16 if jnp.dtype(compute_dtype).itemsize == 2 else 8
    tm = tm if tm is not None else min(512, _round_up(batch, m_align))
    if tm % m_align != 0:
        raise ValueError(f"tm must be a multiple of {m_align}, got {tm}")

    bp = _round_up(batch, tm)

    # v7x megacore: ensure at least one 'parallel' axis has >= 2 tiles so both
    # TensorCores get work (single-TC v5e/v6e: keep tiles large, no split).
    if gen == 7 and bp // tm == 1 and np_ // tn == 1:
        if bp >= 2 * m_align and (bp // 2) % m_align == 0:
            tm = bp // 2
        elif np_ >= 256 and (np_ // 2) % 128 == 0:
            tn = np_ // 2

    x_c = x.astype(compute_dtype) if x.dtype != compute_dtype else x
    if bp != batch or kp != d_in:
        x_c = jnp.pad(x_c, ((0, bp - batch), (0, kp - d_in)))

    out_dtype = x.dtype
    grid_k = kp // tk
    in_bytes = jnp.dtype(compute_dtype).itemsize
    out_bytes = jnp.dtype(out_dtype).itemsize

    if grid_k == 1:
        # Single reduction step: 2-D grid, no accumulator, no pl.when.
        kernel, scratch, use_acc = _linear_kernel_single_k, [], False
        grid = (bp // tm, np_ // tn)
        in_specs = [
            pl.BlockSpec((tm, tk), lambda i, j: (i, 0)),   # x tile
            pl.BlockSpec((tk, tn), lambda i, j: (0, j)),   # pre-transposed weight
            pl.BlockSpec((1, tn), lambda i, j: (0, j)),    # bias
        ]
        out_specs = pl.BlockSpec((tm, tn), lambda i, j: (i, j))
        semantics = ("parallel", "parallel")
    else:
        if out_dtype == jnp.float32:
            kernel, scratch, use_acc = _linear_kernel_acc_out, [], False
        else:
            kernel = _linear_kernel_acc_scratch
            scratch = [pltpu.VMEM((tm, tn), jnp.float32)]
            use_acc = True
        grid = (bp // tm, np_ // tn, grid_k)
        in_specs = [
            pl.BlockSpec((tm, tk), lambda i, j, k: (i, k)),   # x tile
            pl.BlockSpec((tk, tn), lambda i, j, k: (k, j)),   # pre-transposed weight
            pl.BlockSpec((1, tn), lambda i, j, k: (0, j)),    # bias (k-invariant)
        ]
        out_specs = pl.BlockSpec((tm, tn), lambda i, j, k: (i, j))
        semantics = ("parallel", "parallel", "arbitrary")

    out = pl.pallas_call(
        kernel,
        out_shape=jax.ShapeDtypeStruct((bp, np_), out_dtype),
        grid=grid,
        in_specs=in_specs,
        out_specs=out_specs,
        scratch_shapes=scratch,
        compiler_params=pltpu.CompilerParams(
            dimension_semantics=semantics,
            vmem_limit_bytes=_vmem_limit_bytes(
                tm, tn, tk, in_bytes, out_bytes, use_acc, gen
            ),
        ),
    )(x_c, w_t, b_row)

    if bp != batch or np_ != d_out:
        out = out[:batch, :d_out]
    return out


def linear_forward(x, weight=None, bias=None, *, params=None, tm=None, tn=None,
                   tk=None, compute_dtype=None):
    """y = x @ weight.T + bias  (nn.Linear forward), computed with Pallas.

    Pass either (weight, bias) in PyTorch (D_out, D_in) layout, or a cached
    `params` dict from prepare_linear_params() to avoid re-padding and
    re-transposing the weight on every forward call.
    """
    if params is None:
        if weight is None or bias is None:
            raise ValueError("pass (weight, bias) or a prepared `params` dict")
        # Whole-problem fast path: skip all padding / output slicing for tiny shapes.
        if (tm is None and tn is None and tk is None and compute_dtype is None
                and _fits_single_block(x.shape[0], weight.shape[1], weight.shape[0],
                                       jnp.dtype(x.dtype).itemsize)):
            return _linear_forward_whole(x, weight, bias)
        params = prepare_linear_params(weight, bias, tn=tn, tk=tk,
                                       compute_dtype=compute_dtype)
    return _linear_forward_tiled(x, params, tm=tm)


if __name__ == "__main__":
    # Shapes consistent with the module: batch=8, input_dim=32, output_dim=16.
    B, D_in, D_out = 8, 32, 16

    key = jax.random.PRNGKey(0)
    kx, kw, kb = jax.random.split(key, 3)

    # Deterministic init mimicking nn.Linear's uniform(-1/sqrt(in), 1/sqrt(in)).
    bound = 1.0 / jnp.sqrt(jnp.float32(D_in))
    weight = jax.random.uniform(kw, (D_out, D_in), jnp.float32, -bound, bound)
    bias = jax.random.uniform(kb, (D_out,), jnp.float32, -bound, bound)
    x = jax.random.normal(kx, (B, D_in), jnp.float32)

    # 1) Whole-problem fast path (no padding, no grid).
    y = linear_forward(x, weight, bias)
    jax.block_until_ready(y)
    y_ref = x @ weight.T + bias
    assert y.shape == (B, D_out)
    assert jnp.allclose(y, y_ref, atol=1e-5, rtol=1e-5), "mismatch vs reference (whole path)"

    # 2) Tiled path with cached pre-transposed weight, multi-k reduction,
    #    bias-seeded accumulate-into-output (small explicit tiles to exercise it).
    B2, D_in2, D_out2 = 48, 384, 160
    k2x, k2w, k2b = jax.random.split(jax.random.PRNGKey(1), 3)
    bound2 = 1.0 / jnp.sqrt(jnp.float32(D_in2))
    w2 = jax.random.uniform(k2w, (D_out2, D_in2), jnp.float32, -bound2, bound2)
    b2 = jax.random.uniform(k2b, (D_out2,), jnp.float32, -bound2, bound2)
    x2 = jax.random.normal(k2x, (B2, D_in2), jnp.float32)

    params2 = prepare_linear_params(w2, b2, tn=128, tk=128)   # prepared once, reused
    y2 = linear_forward(x2, params=params2, tm=32)
    jax.block_until_ready(y2)
    y2_ref = x2 @ w2.T + b2
    assert y2.shape == (B2, D_out2)
    assert jnp.allclose(y2, y2_ref, atol=1e-4, rtol=1e-4), "mismatch vs reference (tiled path)"

    print("KERNEL_OK")
</pallas_src>

<mosaic_0001>
module attributes {stable_mosaic.version = 11 : i64} {
  func.func @_linear_kernel_whole(%arg0: memref<8x32xf32, #tpu.memory_space<vmem>>, %arg1: memref<32x16xf32, #tpu.memory_space<vmem>>, %arg2: memref<1x16xf32, #tpu.memory_space<vmem>>, %arg3: memref<8x16xf32, #tpu.memory_space<vmem>>) attributes {dimension_semantics = [], scalar_prefetch = 0 : i64, scratch_operands = 0 : i64, tpu.core_type = #tpu.core_type<tc>} {
    %c0 = arith.constant 0 : index
    %c0_0 = arith.constant 0 : index
    %0 = vector.load %arg0[%c0, %c0_0] : memref<8x32xf32, #tpu.memory_space<vmem>>, vector<8x32xf32>
    %c0_1 = arith.constant 0 : index
    %c0_2 = arith.constant 0 : index
    %1 = vector.load %arg1[%c0_1, %c0_2] : memref<32x16xf32, #tpu.memory_space<vmem>>, vector<32x16xf32>
    %cst = arith.constant dense<0.000000e+00> : vector<8x16xf32>
    %2 = tpu.matmul %0, %1, %cst {dimension_numbers = #tpu.dot_dimension_numbers<[1], [0], [0], [1], [0, 0, 1, 1], [], []>} : vector<8x32xf32>, vector<32x16xf32>, vector<8x16xf32> -> vector<8x16xf32>
    %c0_3 = arith.constant 0 : index
    %c0_4 = arith.constant 0 : index
    %3 = vector.load %arg2[%c0_3, %c0_4] : memref<1x16xf32, #tpu.memory_space<vmem>>, vector<1x16xf32>
    %4 = vector.broadcast %3 : vector<1x16xf32> to vector<8x16xf32>
    %5 = arith.addf %2, %4 : vector<8x16xf32>
    %c0_5 = arith.constant 0 : index
    %c0_6 = arith.constant 0 : index
    %6 = vector.load %arg3[%c0_5, %c0_6] : memref<8x16xf32, #tpu.memory_space<vmem>>, vector<8x16xf32>
    tpu.vector_store %arg3[%c0_5, %c0_6], %5 {strides = array<i32>} : memref<8x16xf32, #tpu.memory_space<vmem>>, vector<8x16xf32>,
    return
  }
}

</mosaic_0001>

<llo_original>
// kernel: tpu_custom_call.1
$region0: #{tpu_custom_call.1}
  #allocation0 [shape = 'u32[]', space=smem, size = 0x4, offset = 0x4, fixed_abs, tag = 'smem constant byte address 0x4 - core index']
  #allocation1 [shape = 'u32[72,128]{1,0:T(1,128)}', space=vmem, size = 0x9000, scoped, tag = 'internal scratch']
  %s0 = inlined_call_operand.vmem [shape: f32[8,32], index: 0, kind: input, shape index: {}]
  %s1 = inlined_call_operand.vmem [shape: f32[32,16], index: 1, kind: input, shape index: {}]
  %s2 = inlined_call_operand.vmem [shape: f32[1,16], index: 2, kind: input, shape index: {}]
  %s3 = inlined_call_operand.hbm [shape: f32[8,16], index: 3, kind: output, shape index: {}]
  %s4 = sld [smem:[#allocation0]]
  $region22: #{tpu_custom_call.1} parent=0
    _
  %s6 = ssub.s32 1, %s4
  %s7 = scalar_select 0, %s6, %s4
  $region1: #{tpu_custom_call.1} parent=0
    #allocation2 [shape = 'u8[4096]{0}', space=vmem, size = 0x1000, scoped, tag = 'output window, operand 0, single buffered']
    #allocation3 [shape = 's32[1]{0}', space=sflag, size = 0x4, scoped, tag = 'scoped memory for tpu_custom_call.1']
    %8 = vsyncpa [#allocation3], 0
    // Predicated region
    $region2: #{tpu_custom_call.1} parent=1 // pred_check
      _
    $region3: #{tpu_custom_call.1} parent=1 // pred_check_branch
      %10 = sbr.rel (0) target = $region5
    $region4: #{tpu_custom_call.1} parent=1 // pred_region
      _
    $region5: #{tpu_custom_call.1} parent=1 // pred_fallthru
      _
    // Predicated region
    $region6: #{tpu_custom_call.1} parent=1 // pred_check
      _
    $region7: #{tpu_custom_call.1} parent=1 // pred_check_branch
      %12 = sbr.rel (0) target = $region9
    $region8: #{tpu_custom_call.1} parent=1 // pred_region
      _
    $region9: #{tpu_custom_call.1} parent=1 // pred_fallthru
      _
    // Predicated region
    $region10: #{tpu_custom_call.1} parent=1 // pred_check
      _
    $region11: #{tpu_custom_call.1} parent=1 // pred_check_branch
      %14 = sbr.rel (0) target = $region13
    $region12: #{tpu_custom_call.1} parent=1 // pred_region
      _
    $region13: #{tpu_custom_call.1} parent=1 // pred_fallthru
      _
    %v15 = vld [vmem:[%s0] sm:$0xff]
    %v16 = vld [vmem:[%s1] sm:$0xff]
    %v17 = vld [vmem:[%s1 + $0x8] sm:$0xff]
    %v18 = vld [vmem:[%s1 + $0x10] sm:$0xff]
    %v19 = vld [vmem:[%s1 + $0x18] sm:$0xff]
    %v20 = vld [vmem:[%s2] sm:$0x1]
    %v22 = vperm.slane %v20, 0
    %vm24 = vcmask 261120
    %v26 = vsel %vm24, %v15, 0
    %28 = vmatpush.msra.mxu0 0.0
    %29 = vmatpush.msra.mxu0 0.0
    %30 = vmatpush.msra.mxu0 0.0
    %31 = vmatpush.msra.mxu0 0.0
    %32 = vmatpush.msra.mxu0 0.0
    %33 = vmatpush.msra.mxu0 0.0
    %34 = vmatpush.msra.mxu0 0.0
    %35 = vmatpush.msra.mxu0 0.0
    %36 = vmatpush.msra.mxu0 0.0
    %37 = vmatpush.msra.mxu0 0.0
    %38 = vmatpush.msra.mxu0 0.0
    %39 = vmatpush.msra.mxu0 0.0
    %40 = vmatpush.msra.mxu0 %v19
    %41 = vmatpush.msra.mxu0 %v18
    %42 = vmatpush.msra.mxu0 %v17
    %43 = vmatpush.msra.mxu0 %v16
    %44 = vmatmul.f32.gmra.mxu0 %v26
    %v45 = vpop.f32.mrf.mxu0
    %v46 = vadd.f32 %v22, %v45
    %47 = vdwg.mxu0
    %vm48 = vcmask 130048
    %49 = vst.msk [vmem:[#allocation2] sm:$0xff] %vm48, %v46
    // Predicated region
    $region14: #{tpu_custom_call.1} parent=1 // pred_check
      _
    $region15: #{tpu_custom_call.1} parent=1 // pred_check_branch
      %51 = sbr.rel (0) target = $region17
    $region16: #{tpu_custom_call.1} parent=1 // pred_region
      %53 = vsyncadd [#allocation3], 0
      %s55 = sshll.u32 [#allocation2], 4
      %s56 = int_to_ptr.vmem [resolvable:$true] %s55
      %s57 = sshll.u32 %s3, 4
      %s58 = int_to_ptr.hbm [resolvable:$true] %s57
      %60 = dma.vmem_to_hbm [thread:$0]  %s56, 128, %s58, [#allocation3]
    $region17: #{tpu_custom_call.1} parent=1 // pred_fallthru
      _
    // Predicated region
    $region18: #{tpu_custom_call.1} parent=1 // pred_check
      _
    $region19: #{tpu_custom_call.1} parent=1 // pred_check_branch
      %62 = sbr.rel (0) target = $region21
    $region20: #{tpu_custom_call.1} parent=1 // pred_region
      %64 = dma.done [#allocation3], 128
    $region21: #{tpu_custom_call.1} parent=1 // pred_fallthru
      _
    %65 = vsyncpa [#allocation3], 1

</llo_original>
